<compile_context>
chip_gen: v5e
topology: v5e:2x2
jax: 0.10.0
libtpu: 0.0.40
codegen_flags: <defaults>
</compile_context>

<pallas_src>
import functools

import jax
import jax.numpy as jnp
from jax.experimental import pallas as pl
from jax.experimental.pallas import tpu as pltpu


LAYER_SIZES = [2, 8, 8, 8, 1]

# Packed-parameter layout: one [8, 32] f32 tile (1 KiB).
#   cols  0:2   W1^T (8x2)      col 19      b1 (8x1)
#   cols  2:10  W2^T (8x8)      col 20      b2 (8x1)
#   cols 10:18  W3^T (8x8)      col 21      b3 (8x1)
#   col  22     b4 (row 0)      cols 23:31  W4 as a [1,8] row (row 0)
_P_ROWS, _P_COLS = 8, 32


def _mlp_kernel(p_ref, x_ref, o_ref, *, compute_dtype):
    """One batch tile: x_ref [2, T] -> o_ref [1, T]  (batch on the lane axis)."""
    p = p_ref[...]                              # [8, 32] f32, resident
    pc = p.astype(compute_dtype)
    x = x_ref[...].astype(compute_dtype)        # [2, T]

    w1t = pc[:, 0:2]                            # [8, 2]
    w2t = pc[:, 2:10]                           # [8, 8]
    w3t = pc[:, 10:18]                          # [8, 8]
    b1 = pc[:, 19:20]                           # [8, 1]
    b2 = pc[:, 20:21]
    b3 = pc[:, 21:22]
    b4 = p[0:1, 22:23]                          # [1, 1] f32
    w4r = pc[0:1, 23:31]                        # [1, 8]

    # Hidden layers: lane-dense [8, T] activations, y = W^T @ h + b, ReLU.
    h = jnp.maximum(jnp.dot(w1t, x, preferred_element_type=compute_dtype) + b1, 0.0)
    h = jnp.maximum(jnp.dot(w2t, h, preferred_element_type=compute_dtype) + b2, 0.0)
    h = jnp.maximum(jnp.dot(w3t, h, preferred_element_type=compute_dtype) + b3, 0.0)

    # Last 8->1 layer on the (otherwise idle) MXU, accumulated in f32.
    z = jnp.dot(w4r, h, preferred_element_type=jnp.float32) + b4        # [1, T]

    # sigmoid(z) = 1 / (1 + exp(-z)); exp and approx reciprocal hit the EUP slot.
    o_ref[...] = pl.reciprocal(1.0 + jnp.exp(-z), approx=True).astype(o_ref.dtype)


def _round_up(n, m):
    return (n + m - 1) // m * m


@functools.partial(jax.jit, static_argnames=("block_batch", "compute_dtype"))
def mlp_forward_feature_major(xt, packed_params, *, block_batch=64 * 1024,
                              compute_dtype=jnp.bfloat16):
    """Fast path.  xt: [2, N] f32 (feature-major), packed_params: [8, 32] f32.

    Returns [1, N] f32.  Use this directly if the data pipeline can hand over
    feature-major inputs; it avoids the wrapper-side transpose entirely.
    block_batch: lanes per grid step (rounded to a multiple of 128).  64K is
    safe on all generations; 128K+ is fine on v6e/v7x (VMEM limit scales).
    """
    in_dim, n = xt.shape

    # Lane constraint: the tile's lane dimension must be a multiple of 128.
    block_batch = _round_up(max(int(block_batch), 128), 128)

    # Pad only to lane granularity (128), NOT to a full tile; the partial last
    # block (if any) is masked by Pallas.
    n_pad = _round_up(n, 128)
    if n_pad != n:
        xt = jnp.pad(xt, ((0, 0), (0, n_pad - n)))

    # Keep >= 2 grid steps for large inputs so v7x can split across its 2 TCs.
    tile = min(block_batch, max(128, _round_up(pl.cdiv(n_pad, 2), 128)))
    grid = pl.cdiv(n_pad, tile)

    # Rough per-lane VMEM budget (double-buffered I/O blocks + activations)
    # ~ 320 B/lane; raise the scoped VMEM limit accordingly (v5e default is
    # only 16 MiB, v7x scoped default 32 MiB).
    vmem_limit = int(min(128 * 1024 * 1024, max(32 * 1024 * 1024, 320 * tile)))

    out = pl.pallas_call(
        functools.partial(_mlp_kernel, compute_dtype=compute_dtype),
        out_shape=jax.ShapeDtypeStruct((1, n_pad), jnp.float32),
        grid=(grid,),
        in_specs=[
            # Packed params: constant block index -> resident, single DMA.
            pl.BlockSpec((_P_ROWS, _P_COLS), lambda i: (0, 0)),
            # Input tile [2, tile]: lane-dense, auto double-buffered.
            pl.BlockSpec((in_dim, tile), lambda i: (0, i)),
        ],
        out_specs=pl.BlockSpec((1, tile), lambda i: (0, i)),
        compiler_params=pltpu.CompilerParams(
            dimension_semantics=("parallel",),
            vmem_limit_bytes=vmem_limit),
    )(packed_params, xt)

    return out[:, :n]


def mlp_forward(x, packed_params, *, block_batch=64 * 1024,
                compute_dtype=jnp.bfloat16):
    """PyTorch-interface path.  x: [batch, 2] f32 -> [batch, 1] f32."""
    out_t = mlp_forward_feature_major(
        x.T, packed_params, block_batch=block_batch, compute_dtype=compute_dtype)
    return out_t.T


def init_params(key, layer_sizes):
    """PyTorch-style U(-1/sqrt(fan_in), 1/sqrt(fan_in)) init.

    Returns [(W, b), ...] with W: [in, out], b: [out]  (y = x @ W + b, matching
    PyTorch's x @ W_torch.T + b with W_torch = W.T).
    """
    params = []
    for fan_in, fan_out in zip(layer_sizes[:-1], layer_sizes[1:]):
        key, kw, kb = jax.random.split(key, 3)
        bound = 1.0 / float(fan_in) ** 0.5
        w = jax.random.uniform(kw, (fan_in, fan_out), jnp.float32, -bound, bound)
        b = jax.random.uniform(kb, (fan_out,), jnp.float32, -bound, bound)
        params.append((w, b))
    return params


def pack_params(params):
    """Pack the whole [2, 8, 8, 8, 1] MLP into one [8, 32] f32 tile."""
    (w1, b1), (w2, b2), (w3, b3), (w4, b4) = params
    p = jnp.zeros((_P_ROWS, _P_COLS), jnp.float32)
    p = p.at[:, 0:2].set(w1.T)              # [8, 2]
    p = p.at[:, 2:10].set(w2.T)             # [8, 8]
    p = p.at[:, 10:18].set(w3.T)            # [8, 8]
    p = p.at[:, 19:20].set(b1[:, None])
    p = p.at[:, 20:21].set(b2[:, None])
    p = p.at[:, 21:22].set(b3[:, None])
    p = p.at[0:1, 22:23].set(b4[:, None])   # scalar b4
    p = p.at[0, 23:31].set(w4[:, 0])        # W4 as a [1, 8] row
    return p


def reference_forward(x, params):
    """Pure-JAX reference (mirrors the PyTorch module)."""
    h = x
    for i, (w, b) in enumerate(params):
        h = h @ w + b
        if i < len(params) - 1:
            h = jnp.maximum(h, 0.0)
    return jax.nn.sigmoid(h)


if __name__ == "__main__":
    key = jax.random.PRNGKey(0)
    key, kx1, kx2, kx3 = jax.random.split(key, 4)

    params = init_params(key, LAYER_SIZES)
    packed = pack_params(params)

    # 1) Small-shape check, f32 compute (tight tolerance; single grid step).
    batch = 8
    x = jax.random.normal(kx1, (batch, LAYER_SIZES[0]), jnp.float32)
    out = jax.block_until_ready(mlp_forward(x, packed, compute_dtype=jnp.float32))
    ref = reference_forward(x, params)
    assert out.shape == (batch, LAYER_SIZES[-1])
    err = float(jnp.max(jnp.abs(out - ref)))
    assert jnp.allclose(out, ref, atol=2e-3, rtol=2e-3), err

    # 2) Multi-tile check, default bf16 hidden compute (grid = 4 even steps).
    batch2 = 1000
    x2 = jax.random.normal(kx2, (batch2, LAYER_SIZES[0]), jnp.float32)
    out2 = jax.block_until_ready(mlp_forward(x2, packed, block_batch=256))
    ref2 = reference_forward(x2, params)
    assert out2.shape == (batch2, LAYER_SIZES[-1])
    err2 = float(jnp.max(jnp.abs(out2 - ref2)))
    assert jnp.allclose(out2, ref2, atol=1e-2, rtol=1e-2), err2

    # 3) Partial-last-block check via the feature-major fast path
    #    (batch 600 -> padded 640, tile 256, grid 3, last block masked).
    batch3 = 600
    x3 = jax.random.normal(kx3, (batch3, LAYER_SIZES[0]), jnp.float32)
    out3_t = jax.block_until_ready(
        mlp_forward_feature_major(x3.T, packed, block_batch=256))
    ref3 = reference_forward(x3, params)
    assert out3_t.shape == (1, batch3)
    err3 = float(jnp.max(jnp.abs(out3_t.T - ref3)))
    assert jnp.allclose(out3_t.T, ref3, atol=1e-2, rtol=1e-2), err3

    print("KERNEL_OK")
</pallas_src>

<mosaic_0001>
module attributes {stable_mosaic.version = 11 : i64} {
  func.func @_mlp_kernel(%arg0: i32, %arg1: memref<8x32xf32, #tpu.memory_space<vmem>>, %arg2: memref<2x128xf32, #tpu.memory_space<vmem>>, %arg3: memref<1x128xf32, #tpu.memory_space<vmem>>) attributes {dimension_semantics = [#tpu.dimension_semantics<parallel>], iteration_bounds = array<i64: 1>, scalar_prefetch = 0 : i64, scratch_operands = 0 : i64, tpu.core_type = #tpu.core_type<tc>, window_params = [{pipeline_mode = #tpu.pipeline_mode<synchronous>, transform_indices = @transform_0, window_bounds = array<i64: 8, 32>}, {transform_indices = @transform_1, window_bounds = array<i64: 2, 128>}, {transform_indices = @transform_2, window_bounds = array<i64: 1, 128>}]} {
    %c0 = arith.constant 0 : index
    %c0_0 = arith.constant 0 : index
    %0 = vector.load %arg1[%c0, %c0_0] : memref<8x32xf32, #tpu.memory_space<vmem>>, vector<8x32xf32>
    %c0_1 = arith.constant 0 : index
    %c0_2 = arith.constant 0 : index
    %1 = vector.load %arg2[%c0_1, %c0_2] : memref<2x128xf32, #tpu.memory_space<vmem>>, vector<2x128xf32>
    %2 = vector.extract_strided_slice %0 {offsets = [0, 0], sizes = [8, 2], strides = [1, 1]} : vector<8x32xf32> to vector<8x2xf32>
    %3 = vector.extract_strided_slice %0 {offsets = [0, 2], sizes = [8, 8], strides = [1, 1]} : vector<8x32xf32> to vector<8x8xf32>
    %4 = vector.extract_strided_slice %0 {offsets = [0, 10], sizes = [8, 8], strides = [1, 1]} : vector<8x32xf32> to vector<8x8xf32>
    %5 = vector.extract_strided_slice %0 {offsets = [0, 19], sizes = [8, 1], strides = [1, 1]} : vector<8x32xf32> to vector<8x1xf32>
    %6 = vector.extract_strided_slice %0 {offsets = [0, 20], sizes = [8, 1], strides = [1, 1]} : vector<8x32xf32> to vector<8x1xf32>
    %7 = vector.extract_strided_slice %0 {offsets = [0, 21], sizes = [8, 1], strides = [1, 1]} : vector<8x32xf32> to vector<8x1xf32>
    %8 = vector.extract_strided_slice %0 {offsets = [0, 22], sizes = [1, 1], strides = [1, 1]} : vector<8x32xf32> to vector<1x1xf32>
    %9 = vector.extract_strided_slice %0 {offsets = [0, 23], sizes = [1, 8], strides = [1, 1]} : vector<8x32xf32> to vector<1x8xf32>
    %cst = arith.constant dense<0.000000e+00> : vector<8x128xf32>
    %10 = tpu.matmul %2, %1, %cst {dimension_numbers = #tpu.dot_dimension_numbers<[1], [0], [0], [1], [0, 0, 1, 1], [], []>} : vector<8x2xf32>, vector<2x128xf32>, vector<8x128xf32> -> vector<8x128xf32>
    %11 = vector.broadcast %5 : vector<8x1xf32> to vector<8x128xf32>
    %12 = arith.addf %10, %11 : vector<8x128xf32>
    %cst_3 = arith.constant 0.000000e+00 : f32
    %13 = vector.broadcast %cst_3 : f32 to vector<8x128xf32>
    %14 = arith.maximumf %12, %13 : vector<8x128xf32>
    %cst_4 = arith.constant dense<0.000000e+00> : vector<8x128xf32>
    %15 = tpu.matmul %3, %14, %cst_4 {dimension_numbers = #tpu.dot_dimension_numbers<[1], [0], [0], [1], [0, 0, 1, 1], [], []>} : vector<8x8xf32>, vector<8x128xf32>, vector<8x128xf32> -> vector<8x128xf32>
    %16 = vector.broadcast %6 : vector<8x1xf32> to vector<8x128xf32>
    %17 = arith.addf %15, %16 : vector<8x128xf32>
    %cst_5 = arith.constant 0.000000e+00 : f32
    %18 = vector.broadcast %cst_5 : f32 to vector<8x128xf32>
    %19 = arith.maximumf %17, %18 : vector<8x128xf32>
    %cst_6 = arith.constant dense<0.000000e+00> : vector<8x128xf32>
    %20 = tpu.matmul %4, %19, %cst_6 {dimension_numbers = #tpu.dot_dimension_numbers<[1], [0], [0], [1], [0, 0, 1, 1], [], []>} : vector<8x8xf32>, vector<8x128xf32>, vector<8x128xf32> -> vector<8x128xf32>
    %21 = vector.broadcast %7 : vector<8x1xf32> to vector<8x128xf32>
    %22 = arith.addf %20, %21 : vector<8x128xf32>
    %cst_7 = arith.constant 0.000000e+00 : f32
    %23 = vector.broadcast %cst_7 : f32 to vector<8x128xf32>
    %24 = arith.maximumf %22, %23 : vector<8x128xf32>
    %cst_8 = arith.constant dense<0.000000e+00> : vector<1x128xf32>
    %25 = tpu.matmul %9, %24, %cst_8 {dimension_numbers = #tpu.dot_dimension_numbers<[1], [0], [0], [1], [0, 0, 1, 1], [], []>} : vector<1x8xf32>, vector<8x128xf32>, vector<1x128xf32> -> vector<1x128xf32>
    %26 = vector.broadcast %8 : vector<1x1xf32> to vector<1x128xf32>
    %27 = arith.addf %25, %26 : vector<1x128xf32>
    %cst_9 = arith.constant 0.000000e+00 : f32
    %28 = vector.broadcast %cst_9 : f32 to vector<1x128xf32>
    %29 = arith.subf %28, %27 : vector<1x128xf32>
    %30 = math.exp %29 : vector<1x128xf32>
    %cst_10 = arith.constant 1.000000e+00 : f32
    %31 = vector.broadcast %cst_10 : f32 to vector<1x128xf32>
    %32 = arith.addf %31, %30 : vector<1x128xf32>
    %33 = tpu.reciprocal %32 {approx = true} : vector<1x128xf32> -> vector<1x128xf32>
    %c0_11 = arith.constant 0 : index
    %c0_12 = arith.constant 0 : index
    %34 = vector.load %arg3[%c0_11, %c0_12] : memref<1x128xf32, #tpu.memory_space<vmem>>, vector<1x128xf32>
    tpu.vector_store %arg3[%c0_11, %c0_12], %33 {strides = array<i32>} : memref<1x128xf32, #tpu.memory_space<vmem>>, vector<1x128xf32>,
    return
  }
  func.func @transform_0(%arg0: i32) -> (i32, i32) {
    %c0_i32 = arith.constant 0 : i32
    %c0_i32_0 = arith.constant 0 : i32
    %c0_i32_1 = arith.constant 0 : i32
    return %c0_i32, %c0_i32_0 : i32, i32
  }
  func.func @transform_1(%arg0: i32) -> (i32, i32) {
    %c0_i32 = arith.constant 0 : i32
    %c0_i32_0 = arith.constant 0 : i32
    return %c0_i32, %arg0 : i32, i32
  }
  func.func @transform_2(%arg0: i32) -> (i32, i32) {
    %c0_i32 = arith.constant 0 : i32
    %c0_i32_0 = arith.constant 0 : i32
    return %c0_i32, %arg0 : i32, i32
  }
}

</mosaic_0001>

<llo_original>
// kernel: mlp_forward_feature_major.1
$region0: #{mlp_forward_feature_major.1}
  #allocation0 [shape = 'u32[]', space=smem, size = 0x4, offset = 0x4, fixed_abs, tag = 'smem constant byte address 0x4 - core index']
  #allocation1 [shape = 'u32[72,128]{1,0:T(1,128)}', space=vmem, size = 0x9000, scoped, tag = 'internal scratch']
  %s0 = inlined_call_operand.hbm [shape: f32[8,32], index: 0, kind: input, shape index: {}]
  %s1 = inlined_call_operand.vmem [shape: f32[2,128], index: 1, kind: input, shape index: {}]
  %s2 = inlined_call_operand.hbm [shape: f32[1,128], index: 2, kind: output, shape index: {}]
  %s3 = sld [smem:[#allocation0]]
  $region22: #{mlp_forward_feature_major.1} parent=0
    _
  %s5 = ssub.s32 1, %s3
  %s6 = scalar_select 0, %s5, %s3
  $region1: #{mlp_forward_feature_major.1} parent=0
    #allocation2 [shape = 'u8[4096]{0}', space=vmem, size = 0x1000, scoped, tag = 'input window, operand 0, single buffered']
    #allocation3 [shape = 's32[1]{0}', space=sflag, size = 0x4, scoped, tag = 'scoped memory for mlp_forward_feature_major.1']
    #allocation4 [shape = 's32[1]{0}', space=sflag, size = 0x4, scoped, tag = 'scoped memory for mlp_forward_feature_major.1']
    #allocation5 [shape = 'u8[512]{0}', space=vmem, size = 0x400, scoped, tag = 'output window, operand 0, single buffered']
    %7 = vsyncpa [#allocation3], 0
    %8 = vsyncpa [#allocation4], 0
    // Predicated region
    $region2: #{mlp_forward_feature_major.1} parent=1 // pred_check
      _
    $region3: #{mlp_forward_feature_major.1} parent=1 // pred_check_branch
      %10 = sbr.rel (0) target = $region5
    $region4: #{mlp_forward_feature_major.1} parent=1 // pred_region
      %12 = vsyncadd [#allocation3], 0
      %s14 = sshll.u32 %s0, 4
      %s15 = int_to_ptr.hbm [resolvable:$true] %s14
      %s16 = sshll.u32 [#allocation2], 4
      %s17 = int_to_ptr.vmem [resolvable:$true] %s16
      %19 = dma.hbm_to_vmem [thread:$0]  %s15, 128, %s17, [#allocation3]
    $region5: #{mlp_forward_feature_major.1} parent=1 // pred_fallthru
      _
    // Predicated region
    $region6: #{mlp_forward_feature_major.1} parent=1 // pred_check
      _
    $region7: #{mlp_forward_feature_major.1} parent=1 // pred_check_branch
      %21 = sbr.rel (0) target = $region9
    $region8: #{mlp_forward_feature_major.1} parent=1 // pred_region
      _
    $region9: #{mlp_forward_feature_major.1} parent=1 // pred_fallthru
      _
    // Predicated region
    $region10: #{mlp_forward_feature_major.1} parent=1 // pred_check
      _
    $region11: #{mlp_forward_feature_major.1} parent=1 // pred_check_branch
      %23 = sbr.rel (0) target = $region13
    $region12: #{mlp_forward_feature_major.1} parent=1 // pred_region
      %25 = dma.done [#allocation3], 128
    $region13: #{mlp_forward_feature_major.1} parent=1 // pred_fallthru
      _
    %v26 = vld [vmem:[#allocation2] sm:$0xff]
    %v27 = vld [vmem:[%s1] sm:$0x3]
    %29 = vset.pattern.permute.xlu0 19
    %30 = vperm.xlu0 %29, %v26
    %v31 = vpop.permute.xlu0 %30
    %vm33 = vcmask 15360
    %v34 = vsel %vm33, %v26, 0
    %vm36 = vcmask 1041408
    %v38 = vsel %vm36, %v27, 0
    %40 = vmatpush.msra.mxu0 0.0
    %41 = vmatpush.msra.mxu0 0.0
    %42 = vmatpush.msra.mxu0 0.0
    %43 = vmatpush.msra.mxu0 0.0
    %44 = vmatpush.msra.mxu0 0.0
    %45 = vmatpush.msra.mxu0 0.0
    %46 = vmatpush.msra.mxu0 0.0
    %47 = vmatpush.msra.mxu0 0.0
    %48 = vmatpush.msra.mxu0 0.0
    %49 = vmatpush.msra.mxu0 0.0
    %50 = vmatpush.msra.mxu0 0.0
    %51 = vmatpush.msra.mxu0 0.0
    %52 = vmatpush.msra.mxu0 0.0
    %53 = vmatpush.msra.mxu0 0.0
    %54 = vmatpush.msra.mxu0 0.0
    %55 = vmatpush.msra.mxu0 %v38
    %56 = vmatmul.f32.gmra.mxu0 %v34
    %v57 = vpop.f32.mrf.mxu0
    %v58 = vadd.f32 %v31, %v57
    %59 = vdwg.mxu0
    %v60 = vmax.f32 %v58, 0.0
    %61 = vset.pattern.permute.xlu0 20
    %62 = vperm.xlu0 %61, %v26
    %v63 = vpop.permute.xlu0 %62
    %65 = vrot.lane.b32.xlu0 %v26, 126
    %v66 = vpop.permute.xlu0 %65
    %vm67 = vcmask 64512
    %v68 = vsel %vm67, %v66, 0
    %70 = vmatpush.msra.mxu0 0.0
    %71 = vmatpush.msra.mxu0 0.0
    %72 = vmatpush.msra.mxu0 0.0
    %73 = vmatpush.msra.mxu0 0.0
    %74 = vmatpush.msra.mxu0 0.0
    %75 = vmatpush.msra.mxu0 0.0
    %76 = vmatpush.msra.mxu0 0.0
    %77 = vmatpush.msra.mxu0 0.0
    %78 = vmatpush.msra.mxu0 0.0
    %79 = vmatpush.msra.mxu0 0.0
    %80 = vmatpush.msra.mxu0 0.0
    %81 = vmatpush.msra.mxu0 0.0
    %82 = vmatpush.msra.mxu0 0.0
    %83 = vmatpush.msra.mxu0 0.0
    %84 = vmatpush.msra.mxu0 0.0
    %85 = vmatpush.msra.mxu0 %v60
    %86 = vmatmul.f32.gmra.mxu0 %v68
    %v87 = vpop.f32.mrf.mxu0
    %v88 = vadd.f32 %v63, %v87
    %89 = vdwg.mxu0
    %v90 = vmax.f32 %v88, 0.0
    %91 = vset.pattern.permute.xlu0 21
    %92 = vperm.xlu0 %91, %v26
    %v93 = vpop.permute.xlu0 %92
    %95 = vrot.lane.b32.xlu0 %v26, 118
    %v96 = vpop.permute.xlu0 %95
    %v97 = vsel %vm67, %v96, 0
    %99 = vmatpush.msra.mxu0 0.0
    %100 = vmatpush.msra.mxu0 0.0
    %101 = vmatpush.msra.mxu0 0.0
    %102 = vmatpush.msra.mxu0 0.0
    %103 = vmatpush.msra.mxu0 0.0
    %104 = vmatpush.msra.mxu0 0.0
    %105 = vmatpush.msra.mxu0 0.0
    %106 = vmatpush.msra.mxu0 0.0
    %107 = vmatpush.msra.mxu0 0.0
    %108 = vmatpush.msra.mxu0 0.0
    %109 = vmatpush.msra.mxu0 0.0
    %110 = vmatpush.msra.mxu0 0.0
    %111 = vmatpush.msra.mxu0 0.0
    %112 = vmatpush.msra.mxu0 0.0
    %113 = vmatpush.msra.mxu0 0.0
    %114 = vmatpush.msra.mxu0 %v90
    %115 = vmatmul.f32.gmra.mxu0 %v97
    %v116 = vpop.f32.mrf.mxu0
    %v117 = vadd.f32 %v93, %v116
    %118 = vdwg.mxu0
    %v119 = vmax.f32 %v117, 0.0
    %120 = vset.pattern.permute.xlu0 22
    %121 = vperm.xlu0 %120, %v26
    %v122 = vpop.permute.xlu0 %121
    %124 = vrot.lane.b32.xlu0 %v26, 105
    %v125 = vpop.permute.xlu0 %124
    %v126 = vsel %vm67, %v125, 0
    %128 = vmatpush.msra.mxu0 0.0
    %129 = vmatpush.msra.mxu0 0.0
    %130 = vmatpush.msra.mxu0 0.0
    %131 = vmatpush.msra.mxu0 0.0
    %132 = vmatpush.msra.mxu0 0.0
    %133 = vmatpush.msra.mxu0 0.0
    %134 = vmatpush.msra.mxu0 0.0
    %135 = vmatpush.msra.mxu0 0.0
    %136 = vmatpush.msra.mxu0 0.0
    %137 = vmatpush.msra.mxu0 0.0
    %138 = vmatpush.msra.mxu0 0.0
    %139 = vmatpush.msra.mxu0 0.0
    %140 = vmatpush.msra.mxu0 0.0
    %141 = vmatpush.msra.mxu0 0.0
    %142 = vmatpush.msra.mxu0 0.0
    %143 = vmatpush.msra.mxu0 %v119
    %144 = vmatmul.f32.gmra.mxu0 %v126
    %v145 = vpop.f32.mrf.mxu0
    %v146 = vadd.f32 %v122, %v145
    %147 = vdwg.mxu0
    %v148 = vsub.f32 0.0, %v146
    %v149 = vmul.f32 %v148, 1.442695
    %v150 = vpow.pop %v149
    %v151 = vadd.f32 %v150, 1.0
    %v152 = vrcp.pop %v151
    %153 = vst [vmem:[#allocation5] sm:$0x1] %v152
    // Predicated region
    $region14: #{mlp_forward_feature_major.1} parent=1 // pred_check
      _
    $region15: #{mlp_forward_feature_major.1} parent=1 // pred_check_branch
      %155 = sbr.rel (0) target = $region17
    $region16: #{mlp_forward_feature_major.1} parent=1 // pred_region
      %157 = vsyncadd [#allocation4], 0
      %s159 = sshll.u32 [#allocation5], 4
      %s160 = int_to_ptr.vmem [resolvable:$true] %s159
      %s161 = sshll.u32 %s2, 4
      %s162 = int_to_ptr.hbm [resolvable:$true] %s161
      %164 = dma.vmem_to_hbm [thread:$0]  %s160, 16, %s162, [#allocation4]
    $region17: #{mlp_forward_feature_major.1} parent=1 // pred_fallthru
      _
    // Predicated region
    $region18: #{mlp_forward_feature_major.1} parent=1 // pred_check
      _
    $region19: #{mlp_forward_feature_major.1} parent=1 // pred_check_branch
      %166 = sbr.rel (0) target = $region21
    $region20: #{mlp_forward_feature_major.1} parent=1 // pred_region
      %168 = dma.done [#allocation4], 16
    $region21: #{mlp_forward_feature_major.1} parent=1 // pred_fallthru
      _
    %169 = vsyncpa [#allocation3], 1
    %170 = vsyncpa [#allocation4], 1

</llo_original>
